<compile_context>
chip_gen: v5e
topology: v5e:2x2
jax: 0.10.0
libtpu: 0.0.40
codegen_flags: <defaults>
</compile_context>

<pallas_src>
import math

import jax
import jax.numpy as jnp
from jax.experimental import pallas as pl
from jax.experimental.pallas import tpu as pltpu

# ---------------- config (small, self-consistent) ----------------
BATCH = 2
SEQ = 8
HIDDEN = 32
NUM_HEADS = 4
HEAD_DIM = HIDDEN // NUM_HEADS
MLP_DIM = 64
LN_EPS = 1e-6
BS = BATCH * SEQ
PACK_W = 3 * HIDDEN                      # width of the packed small-param rows (96)

# rows of the packed small-parameter array
(ROW_LN1_W, ROW_LN1_B, ROW_BQKV, ROW_BO,
 ROW_LN2_W, ROW_LN2_B, ROW_B1, ROW_B2) = range(8)


def _gelu(x):
    # TODO(synk): torch F.gelu defaults to the exact erf form; we use the tanh
    # approximation for guaranteed Mosaic lowering (max abs diff ~1e-3).
    return jax.nn.gelu(x, approximate=True)


def _layernorm(x, w, b, eps):
    mu = jnp.mean(x, axis=-1, keepdims=True)
    var = jnp.mean(jnp.square(x - mu), axis=-1, keepdims=True)
    return (x - mu) * jax.lax.rsqrt(var + eps) * w + b


def block_kernel(x_ref, pvec_ref, wqkv_ref, wo_ref, w1_ref, w2_ref, o_ref):
    x = x_ref[...]                                   # (B*S, H)  residual "h"
    pv = pvec_ref[...]                               # (8, 3H)   packed small params

    ln1_w = pv[ROW_LN1_W:ROW_LN1_W + 1, :HIDDEN]
    ln1_b = pv[ROW_LN1_B:ROW_LN1_B + 1, :HIDDEN]
    bqkv = pv[ROW_BQKV:ROW_BQKV + 1, :3 * HIDDEN]
    bo = pv[ROW_BO:ROW_BO + 1, :HIDDEN]
    ln2_w = pv[ROW_LN2_W:ROW_LN2_W + 1, :HIDDEN]
    ln2_b = pv[ROW_LN2_B:ROW_LN2_B + 1, :HIDDEN]
    b1 = pv[ROW_B1:ROW_B1 + 1, :MLP_DIM]
    b2 = pv[ROW_B2:ROW_B2 + 1, :HIDDEN]

    # ---- attention LayerNorm ----
    xn = _layernorm(x, ln1_w, ln1_b, LN_EPS)

    # ---- fused q/k/v projection: one MXU matmul (lane-dense 96-wide output) ----
    qkv = jnp.dot(xn, wqkv_ref[...], preferred_element_type=jnp.float32) + bqkv

    # ---- multi-head scaled dot-product attention, batched over B via 3-D einsums ----
    scale = 1.0 / math.sqrt(HEAD_DIM)
    ctx_parts = []
    for h in range(NUM_HEADS):                       # static 4-iteration unroll
        lo = h * HEAD_DIM
        qh = qkv[:, lo:lo + HEAD_DIM].reshape(BATCH, SEQ, HEAD_DIM)
        kh = qkv[:, HIDDEN + lo:HIDDEN + lo + HEAD_DIM].reshape(BATCH, SEQ, HEAD_DIM)
        vh = qkv[:, 2 * HIDDEN + lo:2 * HIDDEN + lo + HEAD_DIM].reshape(BATCH, SEQ, HEAD_DIM)
        s = jnp.einsum("bqd,bkd->bqk", qh, kh,
                       preferred_element_type=jnp.float32) * scale   # (B, S, S)
        s = s - jnp.max(s, axis=-1, keepdims=True)
        e = jnp.exp(s)
        p = e * pl.reciprocal(jnp.sum(e, axis=-1, keepdims=True), approx=True)
        ctx_parts.append(jnp.einsum("bqk,bkd->bqd", p, vh,
                                    preferred_element_type=jnp.float32))
    ctx = jnp.concatenate(ctx_parts, axis=-1).reshape(BS, HIDDEN)    # (B*S, H)

    attn_out = jnp.dot(ctx, wo_ref[...], preferred_element_type=jnp.float32) + bo
    x1 = attn_out + x                                # first residual

    # ---- MLP LayerNorm + fc1 -> gelu -> fc2 ----
    yn = _layernorm(x1, ln2_w, ln2_b, LN_EPS)
    hdn = _gelu(jnp.dot(yn, w1_ref[...], preferred_element_type=jnp.float32) + b1)
    out = jnp.dot(hdn, w2_ref[...], preferred_element_type=jnp.float32) + b2

    o_ref[...] = out + x1                            # second residual


def block_forward(x, params):
    """x: (B, S, H) float32. Returns (out, attn_weights=None) -- vis=False."""
    B, S, H = x.shape
    x2d = x.reshape(B * S, H)

    # fuse q/k/v weights & biases (y = x @ W + b with W stored as (in, out))
    wqkv = jnp.concatenate([params["wq"], params["wk"], params["wv"]], axis=1)   # (H, 3H)
    bqkv = jnp.concatenate([params["bq"], params["bk"], params["bv"]], axis=1)   # (1, 3H)

    def row(v):
        v = v.reshape(1, -1)
        return jnp.pad(v, ((0, 0), (0, PACK_W - v.shape[1])))

    # pack all ten small (1, N) params into a single (8, 3H) array -> one DMA, not ten
    pvec = jnp.concatenate([
        row(params["ln1_w"]), row(params["ln1_b"]),
        row(bqkv), row(params["bo"]),
        row(params["ln2_w"]), row(params["ln2_b"]),
        row(params["b1"]), row(params["b2"]),
    ], axis=0)

    out2d = pl.pallas_call(
        block_kernel,
        out_shape=jax.ShapeDtypeStruct((B * S, H), jnp.float32),
        # Single invocation (no grid): total footprint is a few tens of KiB, far below
        # one grid-step's ~0.35us overhead, so everything is resident in VMEM.
        # TODO(synk): on v7x (2 TensorCores) with larger batches, reintroduce a grid
        # axis with dimension_semantics=("parallel",) to shard across cores, and
        # re-derive tiling against the 64 MiB VMEM when S/H are scaled up.
        compiler_params=pltpu.CompilerParams(vmem_limit_bytes=8 * 1024 * 1024),
    )(x2d, pvec, wqkv, params["wo"], params["w1"], params["w2"])
    return out2d.reshape(B, S, H), None  # vis=False -> attention weights are None


# ---------------- pure-JAX reference (for self-check) ----------------
def block_reference(x, p):
    def ln(x, w, b):
        mu = jnp.mean(x, axis=-1, keepdims=True)
        var = jnp.mean(jnp.square(x - mu), axis=-1, keepdims=True)
        return (x - mu) * jax.lax.rsqrt(var + LN_EPS) * w + b

    h = x
    xn = ln(x, p["ln1_w"][0], p["ln1_b"][0])
    q = xn @ p["wq"] + p["bq"][0]
    k = xn @ p["wk"] + p["bk"][0]
    v = xn @ p["wv"] + p["bv"][0]
    B, S, H = x.shape
    qh = q.reshape(B, S, NUM_HEADS, HEAD_DIM).transpose(0, 2, 1, 3)
    kh = k.reshape(B, S, NUM_HEADS, HEAD_DIM).transpose(0, 2, 1, 3)
    vh = v.reshape(B, S, NUM_HEADS, HEAD_DIM).transpose(0, 2, 1, 3)
    scores = jnp.einsum("bhqd,bhkd->bhqk", qh, kh) / math.sqrt(HEAD_DIM)
    probs = jax.nn.softmax(scores, axis=-1)
    ctx = jnp.einsum("bhqk,bhkd->bhqd", probs, vh)
    ctx = ctx.transpose(0, 2, 1, 3).reshape(B, S, H)
    attn_out = ctx @ p["wo"] + p["bo"][0]
    x1 = attn_out + h
    yn = ln(x1, p["ln2_w"][0], p["ln2_b"][0])
    hdn = jax.nn.gelu(yn @ p["w1"] + p["b1"][0], approximate=True)
    out = hdn @ p["w2"] + p["b2"][0]
    return out + x1


def init_params(key):
    ks = jax.random.split(key, 8)

    def xavier(k, shape):
        fan_in, fan_out = shape
        limit = math.sqrt(6.0 / (fan_in + fan_out))
        return jax.random.uniform(k, shape, jnp.float32, -limit, limit)

    return {
        "ln1_w": jnp.ones((1, HIDDEN), jnp.float32),
        "ln1_b": jnp.zeros((1, HIDDEN), jnp.float32),
        "wq": xavier(ks[0], (HIDDEN, HIDDEN)),
        "bq": jnp.zeros((1, HIDDEN), jnp.float32),
        "wk": xavier(ks[1], (HIDDEN, HIDDEN)),
        "bk": jnp.zeros((1, HIDDEN), jnp.float32),
        "wv": xavier(ks[2], (HIDDEN, HIDDEN)),
        "bv": jnp.zeros((1, HIDDEN), jnp.float32),
        "wo": xavier(ks[3], (HIDDEN, HIDDEN)),
        "bo": jnp.zeros((1, HIDDEN), jnp.float32),
        "ln2_w": jnp.ones((1, HIDDEN), jnp.float32),
        "ln2_b": jnp.zeros((1, HIDDEN), jnp.float32),
        "w1": xavier(ks[4], (HIDDEN, MLP_DIM)),
        "b1": 1e-6 * jax.random.normal(ks[5], (1, MLP_DIM), jnp.float32),
        "w2": xavier(ks[6], (MLP_DIM, HIDDEN)),
        "b2": 1e-6 * jax.random.normal(ks[7], (1, HIDDEN), jnp.float32),
    }


if __name__ == "__main__":
    key = jax.random.PRNGKey(0)
    kx, kp = jax.random.split(key)
    x = jax.random.normal(kx, (BATCH, SEQ, HIDDEN), jnp.float32)
    params = init_params(kp)

    out, weights = block_forward(x, params)
    out = jax.block_until_ready(out)

    ref = block_reference(x, params)
    assert out.shape == (BATCH, SEQ, HIDDEN)
    assert weights is None
    max_diff = float(jnp.max(jnp.abs(out - ref)))
    # tolerance accounts for the EUP approximate reciprocal in the softmax denominator
    assert max_diff < 5e-3, f"mismatch: max abs diff = {max_diff}"
    print("KERNEL_OK")
</pallas_src>

<mosaic_0001>
module attributes {stable_mosaic.version = 11 : i64} {
  func.func @block_kernel(%arg0: memref<16x32xf32, #tpu.memory_space<vmem>>, %arg1: memref<8x96xf32, #tpu.memory_space<vmem>>, %arg2: memref<32x96xf32, #tpu.memory_space<vmem>>, %arg3: memref<32x32xf32, #tpu.memory_space<vmem>>, %arg4: memref<32x64xf32, #tpu.memory_space<vmem>>, %arg5: memref<64x32xf32, #tpu.memory_space<vmem>>, %arg6: memref<16x32xf32, #tpu.memory_space<vmem>>) attributes {dimension_semantics = [], scalar_prefetch = 0 : i64, scratch_operands = 0 : i64, tpu.core_type = #tpu.core_type<tc>} {
    %c0 = arith.constant 0 : index
    %c0_0 = arith.constant 0 : index
    %0 = vector.load %arg0[%c0, %c0_0] : memref<16x32xf32, #tpu.memory_space<vmem>>, vector<16x32xf32>
    %c0_1 = arith.constant 0 : index
    %c0_2 = arith.constant 0 : index
    %1 = vector.load %arg1[%c0_1, %c0_2] : memref<8x96xf32, #tpu.memory_space<vmem>>, vector<8x96xf32>
    %2 = vector.extract_strided_slice %1 {offsets = [0, 0], sizes = [1, 32], strides = [1, 1]} : vector<8x96xf32> to vector<1x32xf32>
    %3 = vector.extract_strided_slice %1 {offsets = [1, 0], sizes = [1, 32], strides = [1, 1]} : vector<8x96xf32> to vector<1x32xf32>
    %4 = vector.extract_strided_slice %1 {offsets = [2, 0], sizes = [1, 96], strides = [1, 1]} : vector<8x96xf32> to vector<1x96xf32>
    %5 = vector.extract_strided_slice %1 {offsets = [3, 0], sizes = [1, 32], strides = [1, 1]} : vector<8x96xf32> to vector<1x32xf32>
    %6 = vector.extract_strided_slice %1 {offsets = [4, 0], sizes = [1, 32], strides = [1, 1]} : vector<8x96xf32> to vector<1x32xf32>
    %7 = vector.extract_strided_slice %1 {offsets = [5, 0], sizes = [1, 32], strides = [1, 1]} : vector<8x96xf32> to vector<1x32xf32>
    %8 = vector.extract_strided_slice %1 {offsets = [6, 0], sizes = [1, 64], strides = [1, 1]} : vector<8x96xf32> to vector<1x64xf32>
    %9 = vector.extract_strided_slice %1 {offsets = [7, 0], sizes = [1, 32], strides = [1, 1]} : vector<8x96xf32> to vector<1x32xf32>
    %cst = arith.constant dense<0.000000e+00> : vector<16xf32>
    %10 = vector.multi_reduction <add>, %0, %cst [1] : vector<16x32xf32> to vector<16xf32>
    %11 = vector.shape_cast %10 : vector<16xf32> to vector<16x1xf32>
    %cst_3 = arith.constant 3.200000e+01 : f32
    %12 = vector.broadcast %cst_3 : f32 to vector<16x1xf32>
    %13 = arith.divf %11, %12 : vector<16x1xf32>
    %14 = vector.broadcast %13 : vector<16x1xf32> to vector<16x32xf32>
    %15 = arith.subf %0, %14 : vector<16x32xf32>
    %16 = arith.mulf %15, %15 : vector<16x32xf32>
    %cst_4 = arith.constant dense<0.000000e+00> : vector<16xf32>
    %17 = vector.multi_reduction <add>, %16, %cst_4 [1] : vector<16x32xf32> to vector<16xf32>
    %18 = vector.shape_cast %17 : vector<16xf32> to vector<16x1xf32>
    %cst_5 = arith.constant 3.200000e+01 : f32
    %19 = vector.broadcast %cst_5 : f32 to vector<16x1xf32>
    %20 = arith.divf %18, %19 : vector<16x1xf32>
    %21 = vector.broadcast %13 : vector<16x1xf32> to vector<16x32xf32>
    %22 = arith.subf %0, %21 : vector<16x32xf32>
    %cst_6 = arith.constant 9.99999997E-7 : f32
    %23 = vector.broadcast %cst_6 : f32 to vector<16x1xf32>
    %24 = arith.addf %20, %23 : vector<16x1xf32>
    %25 = math.rsqrt %24 : vector<16x1xf32>
    %26 = vector.broadcast %25 : vector<16x1xf32> to vector<16x32xf32>
    %27 = arith.mulf %22, %26 : vector<16x32xf32>
    %28 = vector.broadcast %2 : vector<1x32xf32> to vector<16x32xf32>
    %29 = arith.mulf %27, %28 : vector<16x32xf32>
    %30 = vector.broadcast %3 : vector<1x32xf32> to vector<16x32xf32>
    %31 = arith.addf %29, %30 : vector<16x32xf32>
    %c0_7 = arith.constant 0 : index
    %c0_8 = arith.constant 0 : index
    %32 = vector.load %arg2[%c0_7, %c0_8] : memref<32x96xf32, #tpu.memory_space<vmem>>, vector<32x96xf32>
    %cst_9 = arith.constant dense<0.000000e+00> : vector<16x96xf32>
    %33 = tpu.matmul %31, %32, %cst_9 {dimension_numbers = #tpu.dot_dimension_numbers<[1], [0], [0], [1], [0, 0, 1, 1], [], []>} : vector<16x32xf32>, vector<32x96xf32>, vector<16x96xf32> -> vector<16x96xf32>
    %34 = vector.broadcast %4 : vector<1x96xf32> to vector<16x96xf32>
    %35 = arith.addf %33, %34 : vector<16x96xf32>
    %36 = vector.extract_strided_slice %35 {offsets = [0, 0], sizes = [16, 8], strides = [1, 1]} : vector<16x96xf32> to vector<16x8xf32>
    %37 = vector.shape_cast %36 : vector<16x8xf32> to vector<2x8x8xf32>
    %38 = vector.extract_strided_slice %35 {offsets = [0, 32], sizes = [16, 8], strides = [1, 1]} : vector<16x96xf32> to vector<16x8xf32>
    %39 = vector.shape_cast %38 : vector<16x8xf32> to vector<2x8x8xf32>
    %40 = vector.extract_strided_slice %35 {offsets = [0, 64], sizes = [16, 8], strides = [1, 1]} : vector<16x96xf32> to vector<16x8xf32>
    %41 = vector.shape_cast %40 : vector<16x8xf32> to vector<2x8x8xf32>
    "tpu.trace_start"() <{level = 10 : i32, message = "bqd,bkd->bqk"}> : () -> ()
    %cst_10 = arith.constant dense<0.000000e+00> : vector<2x8x8xf32>
    %42 = tpu.matmul %37, %39, %cst_10 {dimension_numbers = #tpu.dot_dimension_numbers<[2], [2], [1], [1], [0, 0, 0, 1, 1, 1], [0], [0]>} : vector<2x8x8xf32>, vector<2x8x8xf32>, vector<2x8x8xf32> -> vector<2x8x8xf32>
    "tpu.trace_stop"() : () -> ()
    %cst_11 = arith.constant 0.353553385 : f32
    %43 = vector.broadcast %cst_11 : f32 to vector<2x8x8xf32>
    %44 = arith.mulf %42, %43 : vector<2x8x8xf32>
    %cst_12 = arith.constant dense<0xFF800000> : vector<2x8xf32>
    %45 = vector.multi_reduction <maximumf>, %44, %cst_12 [2] : vector<2x8x8xf32> to vector<2x8xf32>
    %46 = vector.shape_cast %45 : vector<2x8xf32> to vector<2x8x1xf32>
    %47 = vector.broadcast %46 : vector<2x8x1xf32> to vector<2x8x8xf32>
    %48 = arith.subf %44, %47 : vector<2x8x8xf32>
    %49 = math.exp %48 : vector<2x8x8xf32>
    %cst_13 = arith.constant dense<0.000000e+00> : vector<2x8xf32>
    %50 = vector.multi_reduction <add>, %49, %cst_13 [2] : vector<2x8x8xf32> to vector<2x8xf32>
    %51 = vector.shape_cast %50 : vector<2x8xf32> to vector<2x8x1xf32>
    %52 = tpu.reciprocal %51 {approx = true} : vector<2x8x1xf32> -> vector<2x8x1xf32>
    %53 = vector.broadcast %52 : vector<2x8x1xf32> to vector<2x8x8xf32>
    %54 = arith.mulf %49, %53 : vector<2x8x8xf32>
    "tpu.trace_start"() <{level = 10 : i32, message = "bqk,bkd->bqd"}> : () -> ()
    %cst_14 = arith.constant dense<0.000000e+00> : vector<2x8x8xf32>
    %55 = tpu.matmul %54, %41, %cst_14 {dimension_numbers = #tpu.dot_dimension_numbers<[2], [1], [1], [2], [0, 0, 0, 1, 1, 2], [0], [0]>} : vector<2x8x8xf32>, vector<2x8x8xf32>, vector<2x8x8xf32> -> vector<2x8x8xf32>
    "tpu.trace_stop"() : () -> ()
    %56 = vector.extract_strided_slice %35 {offsets = [0, 8], sizes = [16, 8], strides = [1, 1]} : vector<16x96xf32> to vector<16x8xf32>
    %57 = vector.shape_cast %56 : vector<16x8xf32> to vector<2x8x8xf32>
    %58 = vector.extract_strided_slice %35 {offsets = [0, 40], sizes = [16, 8], strides = [1, 1]} : vector<16x96xf32> to vector<16x8xf32>
    %59 = vector.shape_cast %58 : vector<16x8xf32> to vector<2x8x8xf32>
    %60 = vector.extract_strided_slice %35 {offsets = [0, 72], sizes = [16, 8], strides = [1, 1]} : vector<16x96xf32> to vector<16x8xf32>
    %61 = vector.shape_cast %60 : vector<16x8xf32> to vector<2x8x8xf32>
    "tpu.trace_start"() <{level = 10 : i32, message = "bqd,bkd->bqk"}> : () -> ()
    %cst_15 = arith.constant dense<0.000000e+00> : vector<2x8x8xf32>
    %62 = tpu.matmul %57, %59, %cst_15 {dimension_numbers = #tpu.dot_dimension_numbers<[2], [2], [1], [1], [0, 0, 0, 1, 1, 1], [0], [0]>} : vector<2x8x8xf32>, vector<2x8x8xf32>, vector<2x8x8xf32> -> vector<2x8x8xf32>
    "tpu.trace_stop"() : () -> ()
    %cst_16 = arith.constant 0.353553385 : f32
    %63 = vector.broadcast %cst_16 : f32 to vector<2x8x8xf32>
    %64 = arith.mulf %62, %63 : vector<2x8x8xf32>
    %cst_17 = arith.constant dense<0xFF800000> : vector<2x8xf32>
    %65 = vector.multi_reduction <maximumf>, %64, %cst_17 [2] : vector<2x8x8xf32> to vector<2x8xf32>
    %66 = vector.shape_cast %65 : vector<2x8xf32> to vector<2x8x1xf32>
    %67 = vector.broadcast %66 : vector<2x8x1xf32> to vector<2x8x8xf32>
    %68 = arith.subf %64, %67 : vector<2x8x8xf32>
    %69 = math.exp %68 : vector<2x8x8xf32>
    %cst_18 = arith.constant dense<0.000000e+00> : vector<2x8xf32>
    %70 = vector.multi_reduction <add>, %69, %cst_18 [2] : vector<2x8x8xf32> to vector<2x8xf32>
    %71 = vector.shape_cast %70 : vector<2x8xf32> to vector<2x8x1xf32>
    %72 = tpu.reciprocal %71 {approx = true} : vector<2x8x1xf32> -> vector<2x8x1xf32>
    %73 = vector.broadcast %72 : vector<2x8x1xf32> to vector<2x8x8xf32>
    %74 = arith.mulf %69, %73 : vector<2x8x8xf32>
    "tpu.trace_start"() <{level = 10 : i32, message = "bqk,bkd->bqd"}> : () -> ()
    %cst_19 = arith.constant dense<0.000000e+00> : vector<2x8x8xf32>
    %75 = tpu.matmul %74, %61, %cst_19 {dimension_numbers = #tpu.dot_dimension_numbers<[2], [1], [1], [2], [0, 0, 0, 1, 1, 2], [0], [0]>} : vector<2x8x8xf32>, vector<2x8x8xf32>, vector<2x8x8xf32> -> vector<2x8x8xf32>
    "tpu.trace_stop"() : () -> ()
    %76 = vector.extract_strided_slice %35 {offsets = [0, 16], sizes = [16, 8], strides = [1, 1]} : vector<16x96xf32> to vector<16x8xf32>
    %77 = vector.shape_cast %76 : vector<16x8xf32> to vector<2x8x8xf32>
    %78 = vector.extract_strided_slice %35 {offsets = [0, 48], sizes = [16, 8], strides = [1, 1]} : vector<16x96xf32> to vector<16x8xf32>
    %79 = vector.shape_cast %78 : vector<16x8xf32> to vector<2x8x8xf32>
    %80 = vector.extract_strided_slice %35 {offsets = [0, 80], sizes = [16, 8], strides = [1, 1]} : vector<16x96xf32> to vector<16x8xf32>
    %81 = vector.shape_cast %80 : vector<16x8xf32> to vector<2x8x8xf32>
    "tpu.trace_start"() <{level = 10 : i32, message = "bqd,bkd->bqk"}> : () -> ()
    %cst_20 = arith.constant dense<0.000000e+00> : vector<2x8x8xf32>
    %82 = tpu.matmul %77, %79, %cst_20 {dimension_numbers = #tpu.dot_dimension_numbers<[2], [2], [1], [1], [0, 0, 0, 1, 1, 1], [0], [0]>} : vector<2x8x8xf32>, vector<2x8x8xf32>, vector<2x8x8xf32> -> vector<2x8x8xf32>
    "tpu.trace_stop"() : () -> ()
    %cst_21 = arith.constant 0.353553385 : f32
    %83 = vector.broadcast %cst_21 : f32 to vector<2x8x8xf32>
    %84 = arith.mulf %82, %83 : vector<2x8x8xf32>
    %cst_22 = arith.constant dense<0xFF800000> : vector<2x8xf32>
    %85 = vector.multi_reduction <maximumf>, %84, %cst_22 [2] : vector<2x8x8xf32> to vector<2x8xf32>
    %86 = vector.shape_cast %85 : vector<2x8xf32> to vector<2x8x1xf32>
    %87 = vector.broadcast %86 : vector<2x8x1xf32> to vector<2x8x8xf32>
    %88 = arith.subf %84, %87 : vector<2x8x8xf32>
    %89 = math.exp %88 : vector<2x8x8xf32>
    %cst_23 = arith.constant dense<0.000000e+00> : vector<2x8xf32>
    %90 = vector.multi_reduction <add>, %89, %cst_23 [2] : vector<2x8x8xf32> to vector<2x8xf32>
    %91 = vector.shape_cast %90 : vector<2x8xf32> to vector<2x8x1xf32>
    %92 = tpu.reciprocal %91 {approx = true} : vector<2x8x1xf32> -> vector<2x8x1xf32>
    %93 = vector.broadcast %92 : vector<2x8x1xf32> to vector<2x8x8xf32>
    %94 = arith.mulf %89, %93 : vector<2x8x8xf32>
    "tpu.trace_start"() <{level = 10 : i32, message = "bqk,bkd->bqd"}> : () -> ()
    %cst_24 = arith.constant dense<0.000000e+00> : vector<2x8x8xf32>
    %95 = tpu.matmul %94, %81, %cst_24 {dimension_numbers = #tpu.dot_dimension_numbers<[2], [1], [1], [2], [0, 0, 0, 1, 1, 2], [0], [0]>} : vector<2x8x8xf32>, vector<2x8x8xf32>, vector<2x8x8xf32> -> vector<2x8x8xf32>
    "tpu.trace_stop"() : () -> ()
    %96 = vector.extract_strided_slice %35 {offsets = [0, 24], sizes = [16, 8], strides = [1, 1]} : vector<16x96xf32> to vector<16x8xf32>
    %97 = vector.shape_cast %96 : vector<16x8xf32> to vector<2x8x8xf32>
    %98 = vector.extract_strided_slice %35 {offsets = [0, 56], sizes = [16, 8], strides = [1, 1]} : vector<16x96xf32> to vector<16x8xf32>
    %99 = vector.shape_cast %98 : vector<16x8xf32> to vector<2x8x8xf32>
    %100 = vector.extract_strided_slice %35 {offsets = [0, 88], sizes = [16, 8], strides = [1, 1]} : vector<16x96xf32> to vector<16x8xf32>
    %101 = vector.shape_cast %100 : vector<16x8xf32> to vector<2x8x8xf32>
    "tpu.trace_start"() <{level = 10 : i32, message = "bqd,bkd->bqk"}> : () -> ()
    %cst_25 = arith.constant dense<0.000000e+00> : vector<2x8x8xf32>
    %102 = tpu.matmul %97, %99, %cst_25 {dimension_numbers = #tpu.dot_dimension_numbers<[2], [2], [1], [1], [0, 0, 0, 1, 1, 1], [0], [0]>} : vector<2x8x8xf32>, vector<2x8x8xf32>, vector<2x8x8xf32> -> vector<2x8x8xf32>
    "tpu.trace_stop"() : () -> ()
    %cst_26 = arith.constant 0.353553385 : f32
    %103 = vector.broadcast %cst_26 : f32 to vector<2x8x8xf32>
    %104 = arith.mulf %102, %103 : vector<2x8x8xf32>
    %cst_27 = arith.constant dense<0xFF800000> : vector<2x8xf32>
    %105 = vector.multi_reduction <maximumf>, %104, %cst_27 [2] : vector<2x8x8xf32> to vector<2x8xf32>
    %106 = vector.shape_cast %105 : vector<2x8xf32> to vector<2x8x1xf32>
    %107 = vector.broadcast %106 : vector<2x8x1xf32> to vector<2x8x8xf32>
    %108 = arith.subf %104, %107 : vector<2x8x8xf32>
    %109 = math.exp %108 : vector<2x8x8xf32>
    %cst_28 = arith.constant dense<0.000000e+00> : vector<2x8xf32>
    %110 = vector.multi_reduction <add>, %109, %cst_28 [2] : vector<2x8x8xf32> to vector<2x8xf32>
    %111 = vector.shape_cast %110 : vector<2x8xf32> to vector<2x8x1xf32>
    %112 = tpu.reciprocal %111 {approx = true} : vector<2x8x1xf32> -> vector<2x8x1xf32>
    %113 = vector.broadcast %112 : vector<2x8x1xf32> to vector<2x8x8xf32>
    %114 = arith.mulf %109, %113 : vector<2x8x8xf32>
    "tpu.trace_start"() <{level = 10 : i32, message = "bqk,bkd->bqd"}> : () -> ()
    %cst_29 = arith.constant dense<0.000000e+00> : vector<2x8x8xf32>
    %115 = tpu.matmul %114, %101, %cst_29 {dimension_numbers = #tpu.dot_dimension_numbers<[2], [1], [1], [2], [0, 0, 0, 1, 1, 2], [0], [0]>} : vector<2x8x8xf32>, vector<2x8x8xf32>, vector<2x8x8xf32> -> vector<2x8x8xf32>
    "tpu.trace_stop"() : () -> ()
    %116 = tpu.concatenate %55, %75, %95, %115 in 2 : vector<2x8x8xf32>, vector<2x8x8xf32>, vector<2x8x8xf32>, vector<2x8x8xf32> -> vector<2x8x32xf32>
    %117 = vector.shape_cast %116 : vector<2x8x32xf32> to vector<16x32xf32>
    %c0_30 = arith.constant 0 : index
    %c0_31 = arith.constant 0 : index
    %118 = vector.load %arg3[%c0_30, %c0_31] : memref<32x32xf32, #tpu.memory_space<vmem>>, vector<32x32xf32>
    %cst_32 = arith.constant dense<0.000000e+00> : vector<16x32xf32>
    %119 = tpu.matmul %117, %118, %cst_32 {dimension_numbers = #tpu.dot_dimension_numbers<[1], [0], [0], [1], [0, 0, 1, 1], [], []>} : vector<16x32xf32>, vector<32x32xf32>, vector<16x32xf32> -> vector<16x32xf32>
    %120 = vector.broadcast %5 : vector<1x32xf32> to vector<16x32xf32>
    %121 = arith.addf %119, %120 : vector<16x32xf32>
    %122 = arith.addf %121, %0 : vector<16x32xf32>
    %cst_33 = arith.constant dense<0.000000e+00> : vector<16xf32>
    %123 = vector.multi_reduction <add>, %122, %cst_33 [1] : vector<16x32xf32> to vector<16xf32>
    %124 = vector.shape_cast %123 : vector<16xf32> to vector<16x1xf32>
    %cst_34 = arith.constant 3.200000e+01 : f32
    %125 = vector.broadcast %cst_34 : f32 to vector<16x1xf32>
    %126 = arith.divf %124, %125 : vector<16x1xf32>
    %127 = vector.broadcast %126 : vector<16x1xf32> to vector<16x32xf32>
    %128 = arith.subf %122, %127 : vector<16x32xf32>
    %129 = arith.mulf %128, %128 : vector<16x32xf32>
    %cst_35 = arith.constant dense<0.000000e+00> : vector<16xf32>
    %130 = vector.multi_reduction <add>, %129, %cst_35 [1] : vector<16x32xf32> to vector<16xf32>
    %131 = vector.shape_cast %130 : vector<16xf32> to vector<16x1xf32>
    %cst_36 = arith.constant 3.200000e+01 : f32
    %132 = vector.broadcast %cst_36 : f32 to vector<16x1xf32>
    %133 = arith.divf %131, %132 : vector<16x1xf32>
    %134 = vector.broadcast %126 : vector<16x1xf32> to vector<16x32xf32>
    %135 = arith.subf %122, %134 : vector<16x32xf32>
    %cst_37 = arith.constant 9.99999997E-7 : f32
    %136 = vector.broadcast %cst_37 : f32 to vector<16x1xf32>
    %137 = arith.addf %133, %136 : vector<16x1xf32>
    %138 = math.rsqrt %137 : vector<16x1xf32>
    %139 = vector.broadcast %138 : vector<16x1xf32> to vector<16x32xf32>
    %140 = arith.mulf %135, %139 : vector<16x32xf32>
    %141 = vector.broadcast %6 : vector<1x32xf32> to vector<16x32xf32>
    %142 = arith.mulf %140, %141 : vector<16x32xf32>
    %143 = vector.broadcast %7 : vector<1x32xf32> to vector<16x32xf32>
    %144 = arith.addf %142, %143 : vector<16x32xf32>
    %c0_38 = arith.constant 0 : index
    %c0_39 = arith.constant 0 : index
    %145 = vector.load %arg4[%c0_38, %c0_39] : memref<32x64xf32, #tpu.memory_space<vmem>>, vector<32x64xf32>
    %cst_40 = arith.constant dense<0.000000e+00> : vector<16x64xf32>
    %146 = tpu.matmul %144, %145, %cst_40 {dimension_numbers = #tpu.dot_dimension_numbers<[1], [0], [0], [1], [0, 0, 1, 1], [], []>} : vector<16x32xf32>, vector<32x64xf32>, vector<16x64xf32> -> vector<16x64xf32>
    %147 = vector.broadcast %8 : vector<1x64xf32> to vector<16x64xf32>
    %148 = arith.addf %146, %147 : vector<16x64xf32>
    %149 = arith.mulf %148, %148 : vector<16x64xf32>
    %150 = arith.mulf %148, %149 : vector<16x64xf32>
    %cst_41 = arith.constant 4.471500e-02 : f32
    %151 = vector.broadcast %cst_41 : f32 to vector<16x64xf32>
    %152 = arith.mulf %151, %150 : vector<16x64xf32>
    %153 = arith.addf %148, %152 : vector<16x64xf32>
    %cst_42 = arith.constant 0.797884583 : f32
    %154 = vector.broadcast %cst_42 : f32 to vector<16x64xf32>
    %155 = arith.mulf %154, %153 : vector<16x64xf32>
    %156 = math.tanh %155 : vector<16x64xf32>
    %cst_43 = arith.constant 1.000000e+00 : f32
    %157 = vector.broadcast %cst_43 : f32 to vector<16x64xf32>
    %158 = arith.addf %157, %156 : vector<16x64xf32>
    %cst_44 = arith.constant 5.000000e-01 : f32
    %159 = vector.broadcast %cst_44 : f32 to vector<16x64xf32>
    %160 = arith.mulf %159, %158 : vector<16x64xf32>
    %161 = arith.mulf %148, %160 : vector<16x64xf32>
    %c0_45 = arith.constant 0 : index
    %c0_46 = arith.constant 0 : index
    %162 = vector.load %arg5[%c0_45, %c0_46] : memref<64x32xf32, #tpu.memory_space<vmem>>, vector<64x32xf32>
    %cst_47 = arith.constant dense<0.000000e+00> : vector<16x32xf32>
    %163 = tpu.matmul %161, %162, %cst_47 {dimension_numbers = #tpu.dot_dimension_numbers<[1], [0], [0], [1], [0, 0, 1, 1], [], []>} : vector<16x64xf32>, vector<64x32xf32>, vector<16x32xf32> -> vector<16x32xf32>
    %164 = vector.broadcast %9 : vector<1x32xf32> to vector<16x32xf32>
    %165 = arith.addf %163, %164 : vector<16x32xf32>
    %166 = arith.addf %165, %122 : vector<16x32xf32>
    %c0_48 = arith.constant 0 : index
    %c0_49 = arith.constant 0 : index
    %167 = vector.load %arg6[%c0_48, %c0_49] : memref<16x32xf32, #tpu.memory_space<vmem>>, vector<16x32xf32>
    tpu.vector_store %arg6[%c0_48, %c0_49], %166 {strides = array<i32>} : memref<16x32xf32, #tpu.memory_space<vmem>>, vector<16x32xf32>,
    return
  }
}

</mosaic_0001>

<llo_original>
// kernel: tpu_custom_call.1
$region0: #{tpu_custom_call.1}
  #allocation0 [shape = 'u32[]', space=smem, size = 0x4, offset = 0x4, fixed_abs, tag = 'smem constant byte address 0x4 - core index']
  #allocation1 [shape = 'u32[72,128]{1,0:T(1,128)}', space=vmem, size = 0x9000, scoped, tag = 'internal scratch']
  %s0 = inlined_call_operand.hbm [shape: f32[16,32], index: 0, kind: input, shape index: {}]
  %s1 = inlined_call_operand.hbm [shape: f32[8,96], index: 1, kind: input, shape index: {}]
  %s2 = inlined_call_operand.vmem [shape: f32[32,96], index: 2, kind: input, shape index: {}]
  %s3 = inlined_call_operand.vmem [shape: f32[32,32], index: 3, kind: input, shape index: {}]
  %s4 = inlined_call_operand.vmem [shape: f32[32,64], index: 4, kind: input, shape index: {}]
  %s5 = inlined_call_operand.vmem [shape: f32[64,32], index: 5, kind: input, shape index: {}]
  %s6 = inlined_call_operand.hbm [shape: f32[16,32], index: 6, kind: output, shape index: {}]
  %s7 = sld [smem:[#allocation0]]
  $region42: #{tpu_custom_call.1} parent=0
    _
  %s9 = ssub.s32 1, %s7
  %s10 = scalar_select 0, %s9, %s7
  $region1: #{tpu_custom_call.1} parent=0
    #allocation2 [shape = 'u8[8192]{0}', space=vmem, size = 0x2000, scoped, tag = 'input window, operand 0, single buffered']
    #allocation3 [shape = 's32[1]{0}', space=sflag, size = 0x4, scoped, tag = 'scoped memory for tpu_custom_call.1']
    #allocation4 [shape = 's32[1]{0}', space=sflag, size = 0x4, scoped, tag = 'scoped memory for tpu_custom_call.1']
    #allocation5 [shape = 'u8[4096]{0}', space=vmem, size = 0x1000, scoped, tag = 'input window, operand 1, single buffered']
    #allocation6 [shape = 's32[1]{0}', space=sflag, size = 0x4, scoped, tag = 'scoped memory for tpu_custom_call.1']
    #allocation7 [shape = 'u8[8192]{0}', space=vmem, size = 0x2000, scoped, tag = 'output window, operand 0, single buffered']
    %11 = vsyncpa [#allocation3], 0
    %12 = vsyncpa [#allocation6], 0
    %13 = vsyncpa [#allocation4], 0
    // Predicated region
    $region2: #{tpu_custom_call.1} parent=1 // pred_check
      _
    $region3: #{tpu_custom_call.1} parent=1 // pred_check_branch
      %15 = sbr.rel (0) target = $region5
    $region4: #{tpu_custom_call.1} parent=1 // pred_region
      %17 = vsyncadd [#allocation3], 0
      %s18 = sshll.u32 %s0, 4
      %s19 = int_to_ptr.hbm [resolvable:$true] %s18
      %s20 = sshll.u32 [#allocation2], 4
      %s21 = int_to_ptr.vmem [resolvable:$true] %s20
      %26 = dma.hbm_to_vmem [thread:$0]  %s19, 256, %s21, [#allocation3], 128, 128, 8
    $region5: #{tpu_custom_call.1} parent=1 // pred_fallthru
      _
    // Predicated region
    $region6: #{tpu_custom_call.1} parent=1 // pred_check
      _
    $region7: #{tpu_custom_call.1} parent=1 // pred_check_branch
      %28 = sbr.rel (0) target = $region9
    $region8: #{tpu_custom_call.1} parent=1 // pred_region
      %30 = vsyncadd [#allocation6], 0
      %s32 = sshll.u32 %s1, 4
      %s33 = int_to_ptr.hbm [resolvable:$true] %s32
      %s34 = sshll.u32 [#allocation5], 4
      %s35 = int_to_ptr.vmem [resolvable:$true] %s34
      %37 = dma.hbm_to_vmem [thread:$0]  %s33, 128, %s35, [#allocation6]
    $region9: #{tpu_custom_call.1} parent=1 // pred_fallthru
      _
    // Predicated region
    $region10: #{tpu_custom_call.1} parent=1 // pred_check
      _
    $region11: #{tpu_custom_call.1} parent=1 // pred_check_branch
      %39 = sbr.rel (0) target = $region13
    $region12: #{tpu_custom_call.1} parent=1 // pred_region
      _
    $region13: #{tpu_custom_call.1} parent=1 // pred_fallthru
      _
    // Predicated region
    $region14: #{tpu_custom_call.1} parent=1 // pred_check
      _
    $region15: #{tpu_custom_call.1} parent=1 // pred_check_branch
      %41 = sbr.rel (0) target = $region17
    $region16: #{tpu_custom_call.1} parent=1 // pred_region
      _
    $region17: #{tpu_custom_call.1} parent=1 // pred_fallthru
      _
    // Predicated region
    $region18: #{tpu_custom_call.1} parent=1 // pred_check
      _
    $region19: #{tpu_custom_call.1} parent=1 // pred_check_branch
      %43 = sbr.rel (0) target = $region21
    $region20: #{tpu_custom_call.1} parent=1 // pred_region
      _
    $region21: #{tpu_custom_call.1} parent=1 // pred_fallthru
      _
    // Predicated region
    $region22: #{tpu_custom_call.1} parent=1 // pred_check
      _
    $region23: #{tpu_custom_call.1} parent=1 // pred_check_branch
      %45 = sbr.rel (0) target = $region25
    $region24: #{tpu_custom_call.1} parent=1 // pred_region
      _
    $region25: #{tpu_custom_call.1} parent=1 // pred_fallthru
      _
    // Predicated region
    $region26: #{tpu_custom_call.1} parent=1 // pred_check
      _
    $region27: #{tpu_custom_call.1} parent=1 // pred_check_branch
      %47 = sbr.rel (0) target = $region29
    $region28: #{tpu_custom_call.1} parent=1 // pred_region
      %49 = dma.done [#allocation3], 256
    $region29: #{tpu_custom_call.1} parent=1 // pred_fallthru
      _
    // Predicated region
    $region30: #{tpu_custom_call.1} parent=1 // pred_check
      _
    $region31: #{tpu_custom_call.1} parent=1 // pred_check_branch
      %51 = sbr.rel (0) target = $region33
    $region32: #{tpu_custom_call.1} parent=1 // pred_region
      %53 = dma.done [#allocation6], 128
    $region33: #{tpu_custom_call.1} parent=1 // pred_fallthru
      _
    %v54 = vld [vmem:[#allocation2] sm:$0xff]
    %v55 = vld [vmem:[#allocation2 + $0x8] sm:$0xff]
    %v56 = vld [vmem:[#allocation5] sm:$0xff]
    %vm57 = vcmask 261120
    %v58 = vsel %vm57, %v54, 0.0
    %59 = vadd.xlane.f32.xlu0 %v58
    %v60 = vpop.xlane.xlu0 %59
    %v61 = vsel %vm57, %v55, 0.0
    %62 = vadd.xlane.f32.xlu0 %v61
    %v63 = vpop.xlane.xlu0 %62
    %v64 = vrcp.pop 32.0
    %v65 = vmul.f32 32.0, %v64
    %v66 = vsub.f32 1.0, %v65
    %v67 = vmul.f32 %v64, %v66
    %v68 = vadd.f32 %v64, %v67
    %vm69 = vweird.f32 %v64
    %v70 = vsel %vm69, %v64, %v68
    %v71 = vmul.f32 %v60, %v70
    %v72 = vmul.f32 %v63, %v70
    %v73 = vsub.f32 %v54, %v71
    %v74 = vsub.f32 %v55, %v72
    %v75 = vmul.f32 %v73, %v73
    %v76 = vmul.f32 %v74, %v74
    %v77 = vsel %vm57, %v75, 0.0
    %78 = vadd.xlane.f32.xlu0 %v77
    %v79 = vpop.xlane.xlu0 %78
    %v80 = vsel %vm57, %v76, 0.0
    %81 = vadd.xlane.f32.xlu0 %v80
    %v82 = vpop.xlane.xlu0 %81
    %v83 = vmul.f32 %v79, %v70
    %v84 = vmul.f32 %v82, %v70
    %v85 = vadd.f32 %v83, 1e-06
    %v86 = vadd.f32 %v84, 1e-06
    %v87 = vrsqrt.pop %v85
    %v88 = vmul.f32 %v87, %v85
    %v89 = vmul.f32 %v88, %v87
    %v90 = vmul.f32 0.5, %v89
    %v91 = vsub.f32 1.5, %v90
    %v92 = vmul.f32 %v87, %v91
    %vm93 = vweird.f32 %v85
    %vm94 = vweird.f32 %v87
    %vm95 = vmor %vm93, %vm94
    %v96 = vsel %vm95, %v87, %v92
    %v97 = vrsqrt.pop %v86
    %v98 = vmul.f32 %v97, %v86
    %v99 = vmul.f32 %v98, %v97
    %v100 = vmul.f32 0.5, %v99
    %v101 = vsub.f32 1.5, %v100
    %v102 = vmul.f32 %v97, %v101
    %vm103 = vweird.f32 %v86
    %vm104 = vweird.f32 %v97
    %vm105 = vmor %vm103, %vm104
    %v106 = vsel %vm105, %v97, %v102
    %v107 = vmul.f32 %v73, %v96
    %v108 = vmul.f32 %v74, %v106
    %v109 = vperm.slane %v56, 0
    %v110 = vmul.f32 %v107, %v109
    %v111 = vmul.f32 %v108, %v109
    %v112 = vperm.slane %v56, 1
    %v113 = vadd.f32 %v110, %v112
    %v114 = vadd.f32 %v111, %v112
    %v115 = vld [vmem:[%s2] sm:$0xff]
    %v116 = vld [vmem:[%s2 + $0x8] sm:$0xff]
    %v117 = vld [vmem:[%s2 + $0x10] sm:$0xff]
    %v118 = vld [vmem:[%s2 + $0x18] sm:$0xff]
    %v119 = vperm.slane %v56, 2
    %v121 = vsel %vm57, %v113, 0
    %v124 = vsel %vm57, %v114, 0
    %126 = vmatpush.msra.mxu0 0.0
    %127 = vmatpush.msra.mxu0 0.0
    %128 = vmatpush.msra.mxu0 0.0
    %129 = vmatpush.msra.mxu0 0.0
    %130 = vmatpush.msra.mxu0 0.0
    %131 = vmatpush.msra.mxu0 0.0
    %132 = vmatpush.msra.mxu0 0.0
    %133 = vmatpush.msra.mxu0 0.0
    %134 = vmatpush.msra.mxu0 0.0
    %135 = vmatpush.msra.mxu0 0.0
    %136 = vmatpush.msra.mxu0 0.0
    %137 = vmatpush.msra.mxu0 0.0
    %138 = vmatpush.msra.mxu0 %v118
    %139 = vmatpush.msra.mxu0 %v117
    %140 = vmatpush.msra.mxu0 %v116
    %141 = vmatpush.msra.mxu0 %v115
    %142 = vmatmul.f32.gmra.mxu0 %v121
    %v143 = vpop.f32.mrf.mxu0
    %v144 = vadd.f32 %v119, %v143
    %145 = vmatmul.f32.gmra.mxu0 %v124
    %v146 = vpop.f32.mrf.mxu0
    %v147 = vadd.f32 %v119, %v146
    %148 = vdwg.mxu0
    %150 = vrot.lane.b32.xlu0 %v144, 96
    %v151 = vpop.permute.xlu0 %150
    %vm152 = vcmask 64512
    %v153 = vsel %vm152, %v144, 0
    %v155 = vsel %vm152, %v151, 0
    %157 = vmatpush.xpose.msra.mxu0 0.0
    %158 = vmatpush.xpose.msra.mxu0 0.0
    %159 = vmatpush.xpose.msra.mxu0 0.0
    %160 = vmatpush.xpose.msra.mxu0 0.0
    %161 = vmatpush.xpose.msra.mxu0 0.0
    %162 = vmatpush.xpose.msra.mxu0 0.0
    %163 = vmatpush.xpose.msra.mxu0 0.0
    %164 = vmatpush.xpose.msra.mxu0 0.0
    %165 = vmatpush.xpose.msra.mxu0 0.0
    %166 = vmatpush.xpose.msra.mxu0 0.0
    %167 = vmatpush.xpose.msra.mxu0 0.0
    %168 = vmatpush.xpose.msra.mxu0 0.0
    %169 = vmatpush.xpose.msra.mxu0 0.0
    %170 = vmatpush.xpose.msra.mxu0 0.0
    %171 = vmatpush.xpose.msra.mxu0 0.0
    %172 = vmatpush.xpose.msra.mxu0 %v155
    %173 = vmatmul.f32.gmra.mxu0 %v153
    %v174 = vpop.f32.mrf.mxu0
    %v175 = vadd.f32 0.0, %v174
    %176 = vdwg.mxu0
    %178 = vrot.lane.b32.xlu0 %v147, 96
    %v179 = vpop.permute.xlu0 %178
    %v180 = vsel %vm152, %v147, 0
    %v182 = vsel %vm152, %v179, 0
    %184 = vmatpush.xpose.msra.mxu0 0.0
    %185 = vmatpush.xpose.msra.mxu0 0.0
    %186 = vmatpush.xpose.msra.mxu0 0.0
    %187 = vmatpush.xpose.msra.mxu0 0.0
    %188 = vmatpush.xpose.msra.mxu0 0.0
    %189 = vmatpush.xpose.msra.mxu0 0.0
    %190 = vmatpush.xpose.msra.mxu0 0.0
    %191 = vmatpush.xpose.msra.mxu0 0.0
    %192 = vmatpush.xpose.msra.mxu0 0.0
    %193 = vmatpush.xpose.msra.mxu0 0.0
    %194 = vmatpush.xpose.msra.mxu0 0.0
    %195 = vmatpush.xpose.msra.mxu0 0.0
    %196 = vmatpush.xpose.msra.mxu0 0.0
    %197 = vmatpush.xpose.msra.mxu0 0.0
    %198 = vmatpush.xpose.msra.mxu0 0.0
    %199 = vmatpush.xpose.msra.mxu0 %v182
    %200 = vmatmul.f32.gmra.mxu0 %v180
    %v201 = vpop.f32.mrf.mxu0
    %v202 = vadd.f32 0.0, %v201
    %203 = vdwg.mxu0
    %v204 = vmul.f32 %v175, 0.35355338
    %v205 = vmul.f32 %v202, 0.35355338
    %v206 = vsel %vm152, %v204, -inf
    %207 = vmax.xlane.f32.xlu0 %v206
    %v208 = vpop.xlane.xlu0 %207
    %v209 = vsel %vm152, %v205, -inf
    %210 = vmax.xlane.f32.xlu0 %v209
    %v211 = vpop.xlane.xlu0 %210
    %v212 = vsub.f32 %v204, %v208
    %v213 = vsub.f32 %v205, %v211
    %v214 = vmul.f32 %v212, 1.442695
    %v215 = vpow.pop %v214
    %v216 = vmul.f32 %v213, 1.442695
    %v217 = vpow.pop %v216
    %v218 = vsel %vm152, %v215, 0.0
    %219 = vadd.xlane.f32.xlu0 %v218
    %v220 = vpop.xlane.xlu0 %219
    %v221 = vsel %vm152, %v217, 0.0
    %222 = vadd.xlane.f32.xlu0 %v221
    %v223 = vpop.xlane.xlu0 %222
    %v224 = vrcp.pop %v220
    %v225 = vrcp.pop %v223
    %v226 = vmul.f32 %v215, %v224
    %v227 = vmul.f32 %v217, %v225
    %228 = vrot.lane.b32.xlu0 %v144, 64
    %v229 = vpop.permute.xlu0 %228
    %v232 = vsel %vm152, %v226, 0
    %234 = vmatpush.msra.mxu0 0.0
    %235 = vmatpush.msra.mxu0 0.0
    %236 = vmatpush.msra.mxu0 0.0
    %237 = vmatpush.msra.mxu0 0.0
    %238 = vmatpush.msra.mxu0 0.0
    %239 = vmatpush.msra.mxu0 0.0
    %240 = vmatpush.msra.mxu0 0.0
    %241 = vmatpush.msra.mxu0 0.0
    %242 = vmatpush.msra.mxu0 0.0
    %243 = vmatpush.msra.mxu0 0.0
    %244 = vmatpush.msra.mxu0 0.0
    %245 = vmatpush.msra.mxu0 0.0
    %246 = vmatpush.msra.mxu0 0.0
    %247 = vmatpush.msra.mxu0 0.0
    %248 = vmatpush.msra.mxu0 0.0
    %249 = vmatpush.msra.mxu0 %v229
    %250 = vmatmul.f32.gmra.mxu0 %v232
    %v251 = vpop.f32.mrf.mxu0
    %v252 = vadd.f32 0.0, %v251
    %253 = vdwg.mxu0
    %254 = vrot.lane.b32.xlu0 %v147, 64
    %v255 = vpop.permute.xlu0 %254
    %v258 = vsel %vm152, %v227, 0
    %260 = vmatpush.msra.mxu0 0.0
    %261 = vmatpush.msra.mxu0 0.0
    %262 = vmatpush.msra.mxu0 0.0
    %263 = vmatpush.msra.mxu0 0.0
    %264 = vmatpush.msra.mxu0 0.0
    %265 = vmatpush.msra.mxu0 0.0
    %266 = vmatpush.msra.mxu0 0.0
    %267 = vmatpush.msra.mxu0 0.0
    %268 = vmatpush.msra.mxu0 0.0
    %269 = vmatpush.msra.mxu0 0.0
    %270 = vmatpush.msra.mxu0 0.0
    %271 = vmatpush.msra.mxu0 0.0
    %272 = vmatpush.msra.mxu0 0.0
    %273 = vmatpush.msra.mxu0 0.0
    %274 = vmatpush.msra.mxu0 0.0
    %275 = vmatpush.msra.mxu0 %v255
    %276 = vmatmul.f32.gmra.mxu0 %v258
    %v277 = vpop.f32.mrf.mxu0
    %v278 = vadd.f32 0.0, %v277
    %279 = vdwg.mxu0
    %280 = vrot.lane.b32.xlu0 %v144, 120
    %v281 = vpop.permute.xlu0 %280
    %282 = vrot.lane.b32.xlu0 %v144, 88
    %v283 = vpop.permute.xlu0 %282
    %v284 = vsel %vm152, %v281, 0
    %v286 = vsel %vm152, %v283, 0
    %288 = vmatpush.xpose.msra.mxu0 0.0
    %289 = vmatpush.xpose.msra.mxu0 0.0
    %290 = vmatpush.xpose.msra.mxu0 0.0
    %291 = vmatpush.xpose.msra.mxu0 0.0
    %292 = vmatpush.xpose.msra.mxu0 0.0
    %293 = vmatpush.xpose.msra.mxu0 0.0
    %294 = vmatpush.xpose.msra.mxu0 0.0
    %295 = vmatpush.xpose.msra.mxu0 0.0
    %296 = vmatpush.xpose.msra.mxu0 0.0
    %297 = vmatpush.xpose.msra.mxu0 0.0
    %298 = vmatpush.xpose.msra.mxu0 0.0
    %299 = vmatpush.xpose.msra.mxu0 0.0
    %300 = vmatpush.xpose.msra.mxu0 0.0
    %301 = vmatpush.xpose.msra.mxu0 0.0
    %302 = vmatpush.xpose.msra.mxu0 0.0
    %303 = vmatpush.xpose.msra.mxu0 %v286
    %304 = vmatmul.f32.gmra.mxu0 %v284
    %v305 = vpop.f32.mrf.mxu0
    %v306 = vadd.f32 0.0, %v305
    %307 = vdwg.mxu0
    %308 = vrot.lane.b32.xlu0 %v147, 120
    %v309 = vpop.permute.xlu0 %308
    %310 = vrot.lane.b32.xlu0 %v147, 88
    %v311 = vpop.permute.xlu0 %310
    %v312 = vsel %vm152, %v309, 0
    %v314 = vsel %vm152, %v311, 0
    %316 = vmatpush.xpose.msra.mxu0 0.0
    %317 = vmatpush.xpose.msra.mxu0 0.0
    %318 = vmatpush.xpose.msra.mxu0 0.0
    %319 = vmatpush.xpose.msra.mxu0 0.0
    %320 = vmatpush.xpose.msra.mxu0 0.0
    %321 = vmatpush.xpose.msra.mxu0 0.0
    %322 = vmatpush.xpose.msra.mxu0 0.0
    %323 = vmatpush.xpose.msra.mxu0 0.0
    %324 = vmatpush.xpose.msra.mxu0 0.0
    %325 = vmatpush.xpose.msra.mxu0 0.0
    %326 = vmatpush.xpose.msra.mxu0 0.0
    %327 = vmatpush.xpose.msra.mxu0 0.0
    %328 = vmatpush.xpose.msra.mxu0 0.0
    %329 = vmatpush.xpose.msra.mxu0 0.0
    %330 = vmatpush.xpose.msra.mxu0 0.0
    %331 = vmatpush.xpose.msra.mxu0 %v314
    %332 = vmatmul.f32.gmra.mxu0 %v312
    %v333 = vpop.f32.mrf.mxu0
    %v334 = vadd.f32 0.0, %v333
    %335 = vdwg.mxu0
    %v336 = vmul.f32 %v306, 0.35355338
    %v337 = vmul.f32 %v334, 0.35355338
    %v338 = vsel %vm152, %v336, -inf
    %339 = vmax.xlane.f32.xlu0 %v338
    %v340 = vpop.xlane.xlu0 %339
    %v341 = vsel %vm152, %v337, -inf
    %342 = vmax.xlane.f32.xlu0 %v341
    %v343 = vpop.xlane.xlu0 %342
    %v344 = vsub.f32 %v336, %v340
    %v345 = vsub.f32 %v337, %v343
    %v346 = vmul.f32 %v344, 1.442695
    %v347 = vpow.pop %v346
    %v348 = vmul.f32 %v345, 1.442695
    %v349 = vpow.pop %v348
    %v350 = vsel %vm152, %v347, 0.0
    %351 = vadd.xlane.f32.xlu0 %v350
    %v352 = vpop.xlane.xlu0 %351
    %v353 = vsel %vm152, %v349, 0.0
    %354 = vadd.xlane.f32.xlu0 %v353
    %v355 = vpop.xlane.xlu0 %354
    %v356 = vrcp.pop %v352
    %v357 = vrcp.pop %v355
    %v358 = vmul.f32 %v347, %v356
    %v359 = vmul.f32 %v349, %v357
    %360 = vrot.lane.b32.xlu0 %v144, 56
    %v361 = vpop.permute.xlu0 %360
    %v364 = vsel %vm152, %v358, 0
    %366 = vmatpush.msra.mxu0 0.0
    %367 = vmatpush.msra.mxu0 0.0
    %368 = vmatpush.msra.mxu0 0.0
    %369 = vmatpush.msra.mxu0 0.0
    %370 = vmatpush.msra.mxu0 0.0
    %371 = vmatpush.msra.mxu0 0.0
    %372 = vmatpush.msra.mxu0 0.0
    %373 = vmatpush.msra.mxu0 0.0
    %374 = vmatpush.msra.mxu0 0.0
    %375 = vmatpush.msra.mxu0 0.0
    %376 = vmatpush.msra.mxu0 0.0
    %377 = vmatpush.msra.mxu0 0.0
    %378 = vmatpush.msra.mxu0 0.0
    %379 = vmatpush.msra.mxu0 0.0
    %380 = vmatpush.msra.mxu0 0.0
    %381 = vmatpush.msra.mxu0 %v361
    %382 = vmatmul.f32.gmra.mxu0 %v364
    %v383 = vpop.f32.mrf.mxu0
    %v384 = vadd.f32 0.0, %v383
    %385 = vdwg.mxu0
    %386 = vrot.lane.b32.xlu0 %v147, 56
    %v387 = vpop.permute.xlu0 %386
    %v390 = vsel %vm152, %v359, 0
    %392 = vmatpush.msra.mxu0 0.0
    %393 = vmatpush.msra.mxu0 0.0
    %394 = vmatpush.msra.mxu0 0.0
    %395 = vmatpush.msra.mxu0 0.0
    %396 = vmatpush.msra.mxu0 0.0
    %397 = vmatpush.msra.mxu0 0.0
    %398 = vmatpush.msra.mxu0 0.0
    %399 = vmatpush.msra.mxu0 0.0
    %400 = vmatpush.msra.mxu0 0.0
    %401 = vmatpush.msra.mxu0 0.0
    %402 = vmatpush.msra.mxu0 0.0
    %403 = vmatpush.msra.mxu0 0.0
    %404 = vmatpush.msra.mxu0 0.0
    %405 = vmatpush.msra.mxu0 0.0
    %406 = vmatpush.msra.mxu0 0.0
    %407 = vmatpush.msra.mxu0 %v387
    %408 = vmatmul.f32.gmra.mxu0 %v390
    %v409 = vpop.f32.mrf.mxu0
    %v410 = vadd.f32 0.0, %v409
    %411 = vdwg.mxu0
    %412 = vrot.lane.b32.xlu0 %v144, 112
    %v413 = vpop.permute.xlu0 %412
    %414 = vrot.lane.b32.xlu0 %v144, 80
    %v415 = vpop.permute.xlu0 %414
    %v416 = vsel %vm152, %v413, 0
    %v418 = vsel %vm152, %v415, 0
    %420 = vmatpush.xpose.msra.mxu0 0.0
    %421 = vmatpush.xpose.msra.mxu0 0.0
    %422 = vmatpush.xpose.msra.mxu0 0.0
    %423 = vmatpush.xpose.msra.mxu0 0.0
    %424 = vmatpush.xpose.msra.mxu0 0.0
    %425 = vmatpush.xpose.msra.mxu0 0.0
    %426 = vmatpush.xpose.msra.mxu0 0.0
    %427 = vmatpush.xpose.msra.mxu0 0.0
    %428 = vmatpush.xpose.msra.mxu0 0.0
    %429 = vmatpush.xpose.msra.mxu0 0.0
    %430 = vmatpush.xpose.msra.mxu0 0.0
    %431 = vmatpush.xpose.msra.mxu0 0.0
    %432 = vmatpush.xpose.msra.mxu0 0.0
    %433 = vmatpush.xpose.msra.mxu0 0.0
    %434 = vmatpush.xpose.msra.mxu0 0.0
    %435 = vmatpush.xpose.msra.mxu0 %v418
    %436 = vmatmul.f32.gmra.mxu0 %v416
    %v437 = vpop.f32.mrf.mxu0
    %v438 = vadd.f32 0.0, %v437
    %439 = vdwg.mxu0
    %440 = vrot.lane.b32.xlu0 %v147, 112
    %v441 = vpop.permute.xlu0 %440
    %442 = vrot.lane.b32.xlu0 %v147, 80
    %v443 = vpop.permute.xlu0 %442
    %v444 = vsel %vm152, %v441, 0
    %v446 = vsel %vm152, %v443, 0
    %448 = vmatpush.xpose.msra.mxu0 0.0
    %449 = vmatpush.xpose.msra.mxu0 0.0
    %450 = vmatpush.xpose.msra.mxu0 0.0
    %451 = vmatpush.xpose.msra.mxu0 0.0
    %452 = vmatpush.xpose.msra.mxu0 0.0
    %453 = vmatpush.xpose.msra.mxu0 0.0
    %454 = vmatpush.xpose.msra.mxu0 0.0
    %455 = vmatpush.xpose.msra.mxu0 0.0
    %456 = vmatpush.xpose.msra.mxu0 0.0
    %457 = vmatpush.xpose.msra.mxu0 0.0
    %458 = vmatpush.xpose.msra.mxu0 0.0
    %459 = vmatpush.xpose.msra.mxu0 0.0
    %460 = vmatpush.xpose.msra.mxu0 0.0
    %461 = vmatpush.xpose.msra.mxu0 0.0
    %462 = vmatpush.xpose.msra.mxu0 0.0
    %463 = vmatpush.xpose.msra.mxu0 %v446
    %464 = vmatmul.f32.gmra.mxu0 %v444
    %v465 = vpop.f32.mrf.mxu0
    %v466 = vadd.f32 0.0, %v465
    %467 = vdwg.mxu0
    %v468 = vmul.f32 %v438, 0.35355338
    %v469 = vmul.f32 %v466, 0.35355338
    %v470 = vsel %vm152, %v468, -inf
    %471 = vmax.xlane.f32.xlu0 %v470
    %v472 = vpop.xlane.xlu0 %471
    %v473 = vsel %vm152, %v469, -inf
    %474 = vmax.xlane.f32.xlu0 %v473
    %v475 = vpop.xlane.xlu0 %474
    %v476 = vsub.f32 %v468, %v472
    %v477 = vsub.f32 %v469, %v475
    %v478 = vmul.f32 %v476, 1.442695
    %v479 = vpow.pop %v478
    %v480 = vmul.f32 %v477, 1.442695
    %v481 = vpow.pop %v480
    %v482 = vsel %vm152, %v479, 0.0
    %483 = vadd.xlane.f32.xlu0 %v482
    %v484 = vpop.xlane.xlu0 %483
    %v485 = vsel %vm152, %v481, 0.0
    %486 = vadd.xlane.f32.xlu0 %v485
    %v487 = vpop.xlane.xlu0 %486
    %v488 = vrcp.pop %v484
    %v489 = vrcp.pop %v487
    %v490 = vmul.f32 %v479, %v488
    %v491 = vmul.f32 %v481, %v489
    %492 = vrot.lane.b32.xlu0 %v144, 48
    %v493 = vpop.permute.xlu0 %492
    %v496 = vsel %vm152, %v490, 0
    %498 = vmatpush.msra.mxu0 0.0
    %499 = vmatpush.msra.mxu0 0.0
    %500 = vmatpush.msra.mxu0 0.0
    %501 = vmatpush.msra.mxu0 0.0
    %502 = vmatpush.msra.mxu0 0.0
    %503 = vmatpush.msra.mxu0 0.0
    %504 = vmatpush.msra.mxu0 0.0
    %505 = vmatpush.msra.mxu0 0.0
    %506 = vmatpush.msra.mxu0 0.0
    %507 = vmatpush.msra.mxu0 0.0
    %508 = vmatpush.msra.mxu0 0.0
    %509 = vmatpush.msra.mxu0 0.0
    %510 = vmatpush.msra.mxu0 0.0
    %511 = vmatpush.msra.mxu0 0.0
    %512 = vmatpush.msra.mxu0 0.0
    %513 = vmatpush.msra.mxu0 %v493
    %514 = vmatmul.f32.gmra.mxu0 %v496
    %v515 = vpop.f32.mrf.mxu0
    %v516 = vadd.f32 0.0, %v515
    %517 = vdwg.mxu0
    %518 = vrot.lane.b32.xlu0 %v147, 48
    %v519 = vpop.permute.xlu0 %518
    %v522 = vsel %vm152, %v491, 0
    %524 = vmatpush.msra.mxu0 0.0
    %525 = vmatpush.msra.mxu0 0.0
    %526 = vmatpush.msra.mxu0 0.0
    %527 = vmatpush.msra.mxu0 0.0
    %528 = vmatpush.msra.mxu0 0.0
    %529 = vmatpush.msra.mxu0 0.0
    %530 = vmatpush.msra.mxu0 0.0
    %531 = vmatpush.msra.mxu0 0.0
    %532 = vmatpush.msra.mxu0 0.0
    %533 = vmatpush.msra.mxu0 0.0
    %534 = vmatpush.msra.mxu0 0.0
    %535 = vmatpush.msra.mxu0 0.0
    %536 = vmatpush.msra.mxu0 0.0
    %537 = vmatpush.msra.mxu0 0.0
    %538 = vmatpush.msra.mxu0 0.0
    %539 = vmatpush.msra.mxu0 %v519
    %540 = vmatmul.f32.gmra.mxu0 %v522
    %v541 = vpop.f32.mrf.mxu0
    %v542 = vadd.f32 0.0, %v541
    %543 = vdwg.mxu0
    %544 = vrot.lane.b32.xlu0 %v144, 104
    %v545 = vpop.permute.xlu0 %544
    %546 = vrot.lane.b32.xlu0 %v144, 72
    %v547 = vpop.permute.xlu0 %546
    %v548 = vsel %vm152, %v545, 0
    %v550 = vsel %vm152, %v547, 0
    %552 = vmatpush.xpose.msra.mxu0 0.0
    %553 = vmatpush.xpose.msra.mxu0 0.0
    %554 = vmatpush.xpose.msra.mxu0 0.0
    %555 = vmatpush.xpose.msra.mxu0 0.0
    %556 = vmatpush.xpose.msra.mxu0 0.0
    %557 = vmatpush.xpose.msra.mxu0 0.0
    %558 = vmatpush.xpose.msra.mxu0 0.0
    %559 = vmatpush.xpose.msra.mxu0 0.0
    %560 = vmatpush.xpose.msra.mxu0 0.0
    %561 = vmatpush.xpose.msra.mxu0 0.0
    %562 = vmatpush.xpose.msra.mxu0 0.0
    %563 = vmatpush.xpose.msra.mxu0 0.0
    %564 = vmatpush.xpose.msra.mxu0 0.0
    %565 = vmatpush.xpose.msra.mxu0 0.0
    %566 = vmatpush.xpose.msra.mxu0 0.0
    %567 = vmatpush.xpose.msra.mxu0 %v550
    %568 = vmatmul.f32.gmra.mxu0 %v548
    %v569 = vpop.f32.mrf.mxu0
    %v570 = vadd.f32 0.0, %v569
    %571 = vdwg.mxu0
    %572 = vrot.lane.b32.xlu0 %v147, 104
    %v573 = vpop.permute.xlu0 %572
    %574 = vrot.lane.b32.xlu0 %v147, 72
    %v575 = vpop.permute.xlu0 %574
    %v576 = vsel %vm152, %v573, 0
    %v578 = vsel %vm152, %v575, 0
    %580 = vmatpush.xpose.msra.mxu0 0.0
    %581 = vmatpush.xpose.msra.mxu0 0.0
    %582 = vmatpush.xpose.msra.mxu0 0.0
    %583 = vmatpush.xpose.msra.mxu0 0.0
    %584 = vmatpush.xpose.msra.mxu0 0.0
    %585 = vmatpush.xpose.msra.mxu0 0.0
    %586 = vmatpush.xpose.msra.mxu0 0.0
    %587 = vmatpush.xpose.msra.mxu0 0.0
    %588 = vmatpush.xpose.msra.mxu0 0.0
    %589 = vmatpush.xpose.msra.mxu0 0.0
    %590 = vmatpush.xpose.msra.mxu0 0.0
    %591 = vmatpush.xpose.msra.mxu0 0.0
    %592 = vmatpush.xpose.msra.mxu0 0.0
    %593 = vmatpush.xpose.msra.mxu0 0.0
    %594 = vmatpush.xpose.msra.mxu0 0.0
    %595 = vmatpush.xpose.msra.mxu0 %v578
    %596 = vmatmul.f32.gmra.mxu0 %v576
    %v597 = vpop.f32.mrf.mxu0
    %v598 = vadd.f32 0.0, %v597
    %599 = vdwg.mxu0
    %v600 = vmul.f32 %v570, 0.35355338
    %v601 = vmul.f32 %v598, 0.35355338
    %v602 = vsel %vm152, %v600, -inf
    %603 = vmax.xlane.f32.xlu0 %v602
    %v604 = vpop.xlane.xlu0 %603
    %v605 = vsel %vm152, %v601, -inf
    %606 = vmax.xlane.f32.xlu0 %v605
    %v607 = vpop.xlane.xlu0 %606
    %v608 = vsub.f32 %v600, %v604
    %v609 = vsub.f32 %v601, %v607
    %v610 = vmul.f32 %v608, 1.442695
    %v611 = vpow.pop %v610
    %v612 = vmul.f32 %v609, 1.442695
    %v613 = vpow.pop %v612
    %v614 = vsel %vm152, %v611, 0.0
    %615 = vadd.xlane.f32.xlu0 %v614
    %v616 = vpop.xlane.xlu0 %615
    %v617 = vsel %vm152, %v613, 0.0
    %618 = vadd.xlane.f32.xlu0 %v617
    %v619 = vpop.xlane.xlu0 %618
    %v620 = vrcp.pop %v616
    %v621 = vrcp.pop %v619
    %v622 = vmul.f32 %v611, %v620
    %v623 = vmul.f32 %v613, %v621
    %624 = vrot.lane.b32.xlu0 %v144, 40
    %v625 = vpop.permute.xlu0 %624
    %v628 = vsel %vm152, %v622, 0
    %630 = vmatpush.msra.mxu0 0.0
    %631 = vmatpush.msra.mxu0 0.0
    %632 = vmatpush.msra.mxu0 0.0
    %633 = vmatpush.msra.mxu0 0.0
    %634 = vmatpush.msra.mxu0 0.0
    %635 = vmatpush.msra.mxu0 0.0
    %636 = vmatpush.msra.mxu0 0.0
    %637 = vmatpush.msra.mxu0 0.0
    %638 = vmatpush.msra.mxu0 0.0
    %639 = vmatpush.msra.mxu0 0.0
    %640 = vmatpush.msra.mxu0 0.0
    %641 = vmatpush.msra.mxu0 0.0
    %642 = vmatpush.msra.mxu0 0.0
    %643 = vmatpush.msra.mxu0 0.0
    %644 = vmatpush.msra.mxu0 0.0
    %645 = vmatpush.msra.mxu0 %v625
    %646 = vmatmul.f32.gmra.mxu0 %v628
    %v647 = vpop.f32.mrf.mxu0
    %v648 = vadd.f32 0.0, %v647
    %649 = vdwg.mxu0
    %650 = vrot.lane.b32.xlu0 %v147, 40
    %v651 = vpop.permute.xlu0 %650
    %v654 = vsel %vm152, %v623, 0
    %656 = vmatpush.msra.mxu0 0.0
    %657 = vmatpush.msra.mxu0 0.0
    %658 = vmatpush.msra.mxu0 0.0
    %659 = vmatpush.msra.mxu0 0.0
    %660 = vmatpush.msra.mxu0 0.0
    %661 = vmatpush.msra.mxu0 0.0
    %662 = vmatpush.msra.mxu0 0.0
    %663 = vmatpush.msra.mxu0 0.0
    %664 = vmatpush.msra.mxu0 0.0
    %665 = vmatpush.msra.mxu0 0.0
    %666 = vmatpush.msra.mxu0 0.0
    %667 = vmatpush.msra.mxu0 0.0
    %668 = vmatpush.msra.mxu0 0.0
    %669 = vmatpush.msra.mxu0 0.0
    %670 = vmatpush.msra.mxu0 0.0
    %671 = vmatpush.msra.mxu0 %v651
    %672 = vmatmul.f32.gmra.mxu0 %v654
    %v673 = vpop.f32.mrf.mxu0
    %v674 = vadd.f32 0.0, %v673
    %675 = vdwg.mxu0
    %678 = vrot.lane.b32.xlu0 %v384, 8
    %v679 = vpop.permute.xlu0 %678
    %680 = vrot.lane.b32.xlu0 %v410, 8
    %v681 = vpop.permute.xlu0 %680
    %686 = vrot.lane.b32.xlu0 %v516, 16
    %v687 = vpop.permute.xlu0 %686
    %688 = vrot.lane.b32.xlu0 %v542, 16
    %v689 = vpop.permute.xlu0 %688
    %694 = vrot.lane.b32.xlu0 %v648, 24
    %v695 = vpop.permute.xlu0 %694
    %696 = vrot.lane.b32.xlu0 %v674, 24
    %v697 = vpop.permute.xlu0 %696
    %v700 = vsel %vm152, %v252, %v679
    %v701 = vsel %vm152, %v278, %v681
    %vm702 = vcmask 130048
    %v703 = vsel %vm702, %v700, %v687
    %v704 = vsel %vm702, %v701, %v689
    %vm705 = vcmask 195584
    %v706 = vsel %vm705, %v703, %v695
    %v707 = vsel %vm705, %v704, %v697
    %v708 = vld [vmem:[%s3] sm:$0xff]
    %v709 = vld [vmem:[%s3 + $0x8] sm:$0xff]
    %v710 = vld [vmem:[%s3 + $0x10] sm:$0xff]
    %v711 = vld [vmem:[%s3 + $0x18] sm:$0xff]
    %v712 = vperm.slane %v56, 3
    %v714 = vsel %vm57, %v706, 0
    %v717 = vsel %vm57, %v707, 0
    %719 = vmatpush.msra.mxu0 0.0
    %720 = vmatpush.msra.mxu0 0.0
    %721 = vmatpush.msra.mxu0 0.0
    %722 = vmatpush.msra.mxu0 0.0
    %723 = vmatpush.msra.mxu0 0.0
    %724 = vmatpush.msra.mxu0 0.0
    %725 = vmatpush.msra.mxu0 0.0
    %726 = vmatpush.msra.mxu0 0.0
    %727 = vmatpush.msra.mxu0 0.0
    %728 = vmatpush.msra.mxu0 0.0
    %729 = vmatpush.msra.mxu0 0.0
    %730 = vmatpush.msra.mxu0 0.0
    %731 = vmatpush.msra.mxu0 %v711
    %732 = vmatpush.msra.mxu0 %v710
    %733 = vmatpush.msra.mxu0 %v709
    %734 = vmatpush.msra.mxu0 %v708
    %735 = vmatmul.f32.gmra.mxu0 %v714
    %v736 = vpop.f32.mrf.mxu0
    %v737 = vadd.f32 %v712, %v736
    %738 = vmatmul.f32.gmra.mxu0 %v717
    %v739 = vpop.f32.mrf.mxu0
    %v740 = vadd.f32 %v712, %v739
    %741 = vdwg.mxu0
    %v742 = vadd.f32 %v737, %v54
    %v743 = vadd.f32 %v740, %v55
    %v744 = vsel %vm57, %v742, 0.0
    %745 = vadd.xlane.f32.xlu0 %v744
    %v746 = vpop.xlane.xlu0 %745
    %v747 = vsel %vm57, %v743, 0.0
    %748 = vadd.xlane.f32.xlu0 %v747
    %v749 = vpop.xlane.xlu0 %748
    %v750 = vmul.f32 %v746, %v70
    %v751 = vmul.f32 %v749, %v70
    %v752 = vsub.f32 %v742, %v750
    %v753 = vsub.f32 %v743, %v751
    %v754 = vmul.f32 %v752, %v752
    %v755 = vmul.f32 %v753, %v753
    %v756 = vsel %vm57, %v754, 0.0
    %757 = vadd.xlane.f32.xlu0 %v756
    %v758 = vpop.xlane.xlu0 %757
    %v759 = vsel %vm57, %v755, 0.0
    %760 = vadd.xlane.f32.xlu0 %v759
    %v761 = vpop.xlane.xlu0 %760
    %v762 = vmul.f32 %v758, %v70
    %v763 = vmul.f32 %v761, %v70
    %v764 = vadd.f32 %v762, 1e-06
    %v765 = vadd.f32 %v763, 1e-06
    %v766 = vrsqrt.pop %v764
    %v767 = vmul.f32 %v766, %v764
    %v768 = vmul.f32 %v767, %v766
    %v769 = vmul.f32 0.5, %v768
    %v770 = vsub.f32 1.5, %v769
    %v771 = vmul.f32 %v766, %v770
    %vm772 = vweird.f32 %v764
    %vm773 = vweird.f32 %v766
    %vm774 = vmor %vm772, %vm773
    %v775 = vsel %vm774, %v766, %v771
    %v776 = vrsqrt.pop %v765
    %v777 = vmul.f32 %v776, %v765
    %v778 = vmul.f32 %v777, %v776
    %v779 = vmul.f32 0.5, %v778
    %v780 = vsub.f32 1.5, %v779
    %v781 = vmul.f32 %v776, %v780
    %vm782 = vweird.f32 %v765
    %vm783 = vweird.f32 %v776
    %vm784 = vmor %vm782, %vm783
    %v785 = vsel %vm784, %v776, %v781
    %v786 = vmul.f32 %v752, %v775
    %v787 = vmul.f32 %v753, %v785
    %v788 = vperm.slane %v56, 4
    %v789 = vmul.f32 %v786, %v788
    %v790 = vmul.f32 %v787, %v788
    %v791 = vperm.slane %v56, 5
    %v792 = vadd.f32 %v789, %v791
    %v793 = vadd.f32 %v790, %v791
    %v794 = vld [vmem:[%s4] sm:$0xff]
    %v795 = vld [vmem:[%s4 + $0x8] sm:$0xff]
    %v796 = vld [vmem:[%s4 + $0x10] sm:$0xff]
    %v797 = vld [vmem:[%s4 + $0x18] sm:$0xff]
    %v798 = vperm.slane %v56, 6
    %v800 = vsel %vm57, %v792, 0
    %v803 = vsel %vm57, %v793, 0
    %805 = vmatpush.msra.mxu0 0.0
    %806 = vmatpush.msra.mxu0 0.0
    %807 = vmatpush.msra.mxu0 0.0
    %808 = vmatpush.msra.mxu0 0.0
    %809 = vmatpush.msra.mxu0 0.0
    %810 = vmatpush.msra.mxu0 0.0
    %811 = vmatpush.msra.mxu0 0.0
    %812 = vmatpush.msra.mxu0 0.0
    %813 = vmatpush.msra.mxu0 0.0
    %814 = vmatpush.msra.mxu0 0.0
    %815 = vmatpush.msra.mxu0 0.0
    %816 = vmatpush.msra.mxu0 0.0
    %817 = vmatpush.msra.mxu0 %v797
    %818 = vmatpush.msra.mxu0 %v796
    %819 = vmatpush.msra.mxu0 %v795
    %820 = vmatpush.msra.mxu0 %v794
    %821 = vmatmul.f32.gmra.mxu0 %v800
    %v822 = vpop.f32.mrf.mxu0
    %v823 = vadd.f32 %v798, %v822
    %824 = vmatmul.f32.gmra.mxu0 %v803
    %v825 = vpop.f32.mrf.mxu0
    %v826 = vadd.f32 %v798, %v825
    %827 = vdwg.mxu0
    %v828 = vmul.f32 %v823, %v823
    %v829 = vmul.f32 %v826, %v826
    %v830 = vmul.f32 %v823, %v828
    %v831 = vmul.f32 %v826, %v829
    %v832 = vmul.f32 %v830, 0.044715
    %v833 = vmul.f32 %v831, 0.044715
    %v834 = vadd.f32 %v823, %v832
    %v835 = vadd.f32 %v826, %v833
    %v836 = vmul.f32 %v834, 0.7978846
    %v837 = vmul.f32 %v835, 0.7978846
    %v838 = vtanh.pop %v836
    %v839 = vtanh.pop %v837
    %v840 = vadd.f32 %v838, 1.0
    %v841 = vadd.f32 %v839, 1.0
    %v842 = vmul.f32 %v840, 0.5
    %v843 = vmul.f32 %v841, 0.5
    %v844 = vmul.f32 %v823, %v842
    %v845 = vmul.f32 %v826, %v843
    %v846 = vld [vmem:[%s5] sm:$0xff]
    %v847 = vld [vmem:[%s5 + $0x8] sm:$0xff]
    %v848 = vld [vmem:[%s5 + $0x10] sm:$0xff]
    %v849 = vld [vmem:[%s5 + $0x18] sm:$0xff]
    %v850 = vld [vmem:[%s5 + $0x20] sm:$0xff]
    %v851 = vld [vmem:[%s5 + $0x28] sm:$0xff]
    %v852 = vld [vmem:[%s5 + $0x30] sm:$0xff]
    %v853 = vld [vmem:[%s5 + $0x38] sm:$0xff]
    %v854 = vperm.slane %v56, 7
    %vm855 = vcmask 523264
    %v857 = vsel %vm855, %v844, 0
    %v860 = vsel %vm855, %v845, 0
    %862 = vmatpush.msra.mxu0 0.0
    %863 = vmatpush.msra.mxu0 0.0
    %864 = vmatpush.msra.mxu0 0.0
    %865 = vmatpush.msra.mxu0 0.0
    %866 = vmatpush.msra.mxu0 0.0
    %867 = vmatpush.msra.mxu0 0.0
    %868 = vmatpush.msra.mxu0 0.0
    %869 = vmatpush.msra.mxu0 0.0
    %870 = vmatpush.msra.mxu0 %v853
    %871 = vmatpush.msra.mxu0 %v852
    %872 = vmatpush.msra.mxu0 %v851
    %873 = vmatpush.msra.mxu0 %v850
    %874 = vmatpush.msra.mxu0 %v849
    %875 = vmatpush.msra.mxu0 %v848
    %876 = vmatpush.msra.mxu0 %v847
    %877 = vmatpush.msra.mxu0 %v846
    %878 = vmatmul.f32.gmra.mxu0 %v857
    %v879 = vpop.f32.mrf.mxu0
    %v880 = vadd.f32 %v854, %v879
    %881 = vmatmul.f32.gmra.mxu0 %v860
    %v882 = vpop.f32.mrf.mxu0
    %v883 = vadd.f32 %v854, %v882
    %884 = vdwg.mxu0
    %v885 = vadd.f32 %v880, %v742
    %v886 = vadd.f32 %v883, %v743
    %887 = vst.msk [vmem:[#allocation7] sm:$0xff] %vm57, %v885
    %888 = vst.msk [vmem:[#allocation7 + $0x8] sm:$0xff] %vm57, %v886
    // Predicated region
    $region34: #{tpu_custom_call.1} parent=1 // pred_check
      _
    $region35: #{tpu_custom_call.1} parent=1 // pred_check_branch
      %890 = sbr.rel (0) target = $region37
    $region36: #{tpu_custom_call.1} parent=1 // pred_region
      %892 = vsyncadd [#allocation4], 0
      %s893 = sshll.u32 [#allocation7], 4
      %s894 = int_to_ptr.vmem [resolvable:$true] %s893
      %s895 = sshll.u32 %s6, 4
      %s896 = int_to_ptr.hbm [resolvable:$true] %s895
      %901 = dma.vmem_to_hbm [thread:$0]  %s894, 256, %s896, [#allocation4], 128, 128, 8
    $region37: #{tpu_custom_call.1} parent=1 // pred_fallthru
      _
    // Predicated region
    $region38: #{tpu_custom_call.1} parent=1 // pred_check
      _
    $region39: #{tpu_custom_call.1} parent=1 // pred_check_branch
      %903 = sbr.rel (0) target = $region41
    $region40: #{tpu_custom_call.1} parent=1 // pred_region
      %905 = dma.done [#allocation4], 256
    $region41: #{tpu_custom_call.1} parent=1 // pred_fallthru
      _
    %906 = vsyncpa [#allocation3], 1
    %907 = vsyncpa [#allocation6], 1
    %908 = vsyncpa [#allocation4], 1

</llo_original>
